<compile_context>
chip_gen: v5e
topology: v5e:2x2
jax: 0.10.0
libtpu: 0.0.40
codegen_flags: <defaults>
</compile_context>

<pallas_src>
import math
import functools

import numpy as np
import jax
import jax.numpy as jnp
from jax import lax
from jax.experimental import pallas as pl
from jax.experimental.pallas import tpu as pltpu


# --------------------------------------------------------------------------
# Kernel 1: fused Q/K/V projection + rotary embedding (grid over batch).
# Weight columns are pre-permuted on the host so the Q/K activations come out
# as [all-heads-re | all-heads-im]; RoPE is then
#   out_re = re*cos - im*sin ,  out_im = im*cos + re*sin
# on the two halves -- one matmul worth of MXU FLOPs per projection.
# 1/sqrt(head_dim) is already folded into Wq on the host.
# TODO(synk): at LLaMA scale (D=4096) tile the output-feature (N) dim of the
# weights with an extra grid axis and size tiles against per-chip VMEM
# (64 MiB on v7x); full-array weight blocks are fine only at this demo size.
# --------------------------------------------------------------------------
def qkv_rope_kernel(x_ref, wq_re_ref, wq_im_ref, wk_re_ref, wk_im_ref, wv_ref,
                    cos_q_ref, sin_q_ref, cos_k_ref, sin_k_ref,
                    xq_ref, xk_ref, xv_ref):
    x = x_ref[0]                                                    # [S, D] bf16

    # Q projection + RoPE (scale already folded into the weights).
    q_re = jnp.dot(x, wq_re_ref[...], preferred_element_type=jnp.float32)
    q_im = jnp.dot(x, wq_im_ref[...], preferred_element_type=jnp.float32)
    cq, sq = cos_q_ref[...], sin_q_ref[...]
    q_out = jnp.concatenate([q_re * cq - q_im * sq,
                             q_im * cq + q_re * sq], axis=-1)
    xq_ref[0] = q_out.astype(xq_ref.dtype)                         # lane-dense store

    # K projection + RoPE.
    k_re = jnp.dot(x, wk_re_ref[...], preferred_element_type=jnp.float32)
    k_im = jnp.dot(x, wk_im_ref[...], preferred_element_type=jnp.float32)
    ck, sk = cos_k_ref[...], sin_k_ref[...]
    k_out = jnp.concatenate([k_re * ck - k_im * sk,
                             k_im * ck + k_re * sk], axis=-1)
    xk_ref[0] = k_out.astype(xk_ref.dtype)

    # V projection (no rotation).
    xv_ref[0] = jnp.dot(x, wv_ref[...],
                        preferred_element_type=jnp.float32).astype(xv_ref.dtype)


# --------------------------------------------------------------------------
# Kernel 2: per-(batch, kv-head) attention over the whole KV group.
# Q block is [n_rep*S, hd]; K/V blocks are the full cache slab for that
# (batch, kv-head) read straight from the head-major cache; positions >= L
# (= start_pos + S) are masked out.  Output is the raw attention context per
# group -- the output projection is a separate kernel.
# TODO(synk): for long contexts, tile the max_seq axis with an online-softmax
# (flash-style) loop instead of reading the full cache slab.
# --------------------------------------------------------------------------
def attn_group_kernel(xq_ref, k_ref, v_ref, o_ref, *, ctx_len):
    q = xq_ref[0, 0]                      # [n_rep*S, hd] bf16 (pre-scaled via Wq)
    k = k_ref[0, 0]                       # [max_seq, hd] bf16
    v = v_ref[0, 0]                       # [max_seq, hd] bf16

    # scores = q . k^T, contracting the last dim of both operands.
    scores = lax.dot_general(q, k, (((1,), (1,)), ((), ())),
                             preferred_element_type=jnp.float32)    # [n_rep*S, max_seq]
    col = lax.broadcasted_iota(jnp.int32, scores.shape, 1)
    scores = jnp.where(col < ctx_len, scores, -1e30)                # mask unused rows

    m = jnp.max(scores, axis=-1, keepdims=True)
    p = jnp.exp(scores - m)
    inv = pl.reciprocal(jnp.sum(p, axis=-1, keepdims=True), approx=True)
    p = (p * inv).astype(v.dtype)                                   # bf16 probs

    attn = jnp.dot(p, v, preferred_element_type=jnp.float32)        # [n_rep*S, hd]
    o_ref[0, 0] = attn.astype(o_ref.dtype)


# --------------------------------------------------------------------------
# Kernel 3: output projection as one large matmul per batch element.
# --------------------------------------------------------------------------
def out_proj_kernel(x_ref, w_ref, o_ref):
    o_ref[0] = jnp.dot(x_ref[0], w_ref[...], preferred_element_type=jnp.float32)


# --------------------------------------------------------------------------
# Wrapper: weight prep, the three pallas_calls, cache update glue.
# The kernel-path KV cache is head-major bf16 [max_batch, n_kv, max_seq, hd]
# (internal representation; contents equivalent to the module's cache).
# --------------------------------------------------------------------------
def self_attention_forward(x, start_pos, cos, sin, wq, wk, wv, wo,
                           cache_k, cache_v, n_heads, n_kv_heads):
    B, S, D = x.shape
    hd = D // n_heads
    n_rep = n_heads // n_kv_heads
    hq_half = n_heads * hd // 2
    hk_half = n_kv_heads * hd // 2
    L = start_pos + S                      # static: start_pos is a Python int
    max_batch, _, max_seq, _ = cache_k.shape

    # ---- host-side weight prep (cache these in a real model) ----
    scale = 1.0 / math.sqrt(hd)
    cols_q = np.arange(n_heads * hd).reshape(n_heads, hd)
    cols_k = np.arange(n_kv_heads * hd).reshape(n_kv_heads, hd)
    wq_t = wq.T * scale                                   # fold 1/sqrt(hd) into Wq
    wk_t = wk.T
    wq_re = wq_t[:, cols_q[:, 0::2].reshape(-1)].astype(jnp.bfloat16)
    wq_im = wq_t[:, cols_q[:, 1::2].reshape(-1)].astype(jnp.bfloat16)
    wk_re = wk_t[:, cols_k[:, 0::2].reshape(-1)].astype(jnp.bfloat16)
    wk_im = wk_t[:, cols_k[:, 1::2].reshape(-1)].astype(jnp.bfloat16)
    wv_t = wv.T.astype(jnp.bfloat16)
    wo_t = wo.T.astype(jnp.bfloat16)

    # Rotary factors tiled to half-head width only (f32 for precision).
    cos_q = jnp.tile(cos, (1, n_heads))                   # [S, Hq*hd/2]
    sin_q = jnp.tile(sin, (1, n_heads))
    cos_k = jnp.tile(cos, (1, n_kv_heads))                # [S, Hkv*hd/2]
    sin_k = jnp.tile(sin, (1, n_kv_heads))

    xb = x.astype(jnp.bfloat16)
    rep2 = lambda b: (0, 0)

    # ---- kernel 1: fused QKV + RoPE ----
    xq_flat, xk_flat, xv_flat = pl.pallas_call(
        qkv_rope_kernel,
        out_shape=(jax.ShapeDtypeStruct((B, S, n_heads * hd), jnp.bfloat16),
                   jax.ShapeDtypeStruct((B, S, n_kv_heads * hd), jnp.bfloat16),
                   jax.ShapeDtypeStruct((B, S, n_kv_heads * hd), jnp.bfloat16)),
        grid=(B,),
        in_specs=[pl.BlockSpec((1, S, D), lambda b: (b, 0, 0)),
                  pl.BlockSpec((D, hq_half), rep2),
                  pl.BlockSpec((D, hq_half), rep2),
                  pl.BlockSpec((D, hk_half), rep2),
                  pl.BlockSpec((D, hk_half), rep2),
                  pl.BlockSpec((D, n_kv_heads * hd), rep2),
                  pl.BlockSpec((S, hq_half), rep2),
                  pl.BlockSpec((S, hq_half), rep2),
                  pl.BlockSpec((S, hk_half), rep2),
                  pl.BlockSpec((S, hk_half), rep2)],
        out_specs=(pl.BlockSpec((1, S, n_heads * hd), lambda b: (b, 0, 0)),
                   pl.BlockSpec((1, S, n_kv_heads * hd), lambda b: (b, 0, 0)),
                   pl.BlockSpec((1, S, n_kv_heads * hd), lambda b: (b, 0, 0))),
        compiler_params=pltpu.CompilerParams(dimension_semantics=("parallel",)),
    )(xb, wq_re, wq_im, wk_re, wk_im, wv_t, cos_q, sin_q, cos_k, sin_k)

    # ---- KV cache update (head-major, per-head feature order [re|im]) ----
    xk_heads = (xk_flat.reshape(B, S, 2, n_kv_heads, hd // 2)
                        .transpose(0, 3, 1, 2, 4)
                        .reshape(B, n_kv_heads, S, hd))
    xv_heads = xv_flat.reshape(B, S, n_kv_heads, hd).transpose(0, 2, 1, 3)
    # TODO(synk): an in-kernel aliased cache write needs a sublane-aligned
    # start_pos (or donated buffers under jit) -- kept as small XLA glue over the
    # new tokens only; no full-cache transpose is ever materialized.
    cache_k = lax.dynamic_update_slice(cache_k, xk_heads, (0, 0, start_pos, 0))
    cache_v = lax.dynamic_update_slice(cache_v, xv_heads, (0, 0, start_pos, 0))

    # Queries grouped per KV head: [B, n_kv, n_rep*S, hd] (same per-head layout as K).
    xq_g = (xq_flat.reshape(B, S, 2, n_heads, hd // 2)
                    .transpose(0, 3, 1, 2, 4)              # [B, Hq, S, 2, hd/2]
                    .reshape(B, n_kv_heads, n_rep, S, hd)
                    .reshape(B, n_kv_heads, n_rep * S, hd))

    # ---- kernel 2: grouped attention, cache read in place ----
    o_g = pl.pallas_call(
        functools.partial(attn_group_kernel, ctx_len=L),
        out_shape=jax.ShapeDtypeStruct((B, n_kv_heads, n_rep * S, hd), jnp.bfloat16),
        grid=(B, n_kv_heads),
        in_specs=[pl.BlockSpec((1, 1, n_rep * S, hd), lambda b, g: (b, g, 0, 0)),
                  pl.BlockSpec((1, 1, max_seq, hd), lambda b, g: (b, g, 0, 0)),
                  pl.BlockSpec((1, 1, max_seq, hd), lambda b, g: (b, g, 0, 0))],
        out_specs=pl.BlockSpec((1, 1, n_rep * S, hd), lambda b, g: (b, g, 0, 0)),
        compiler_params=pltpu.CompilerParams(
            dimension_semantics=("parallel", "parallel")),
    )(xq_g, cache_k, cache_v)

    # ---- kernel 3: output projection as one big matmul ----
    attn_ctx = (o_g.reshape(B, n_kv_heads, n_rep, S, hd)
                   .transpose(0, 3, 1, 2, 4)
                   .reshape(B, S, n_heads * hd))
    out = pl.pallas_call(
        out_proj_kernel,
        out_shape=jax.ShapeDtypeStruct((B, S, D), jnp.float32),
        grid=(B,),
        in_specs=[pl.BlockSpec((1, S, n_heads * hd), lambda b: (b, 0, 0)),
                  pl.BlockSpec((n_heads * hd, D), rep2)],
        out_specs=pl.BlockSpec((1, S, D), lambda b: (b, 0, 0)),
        compiler_params=pltpu.CompilerParams(dimension_semantics=("parallel",)),
    )(attn_ctx, wo_t)

    return out, cache_k, cache_v


# --------------------------------------------------------------------------
# Pure-JAX f32 reference (mirrors the PyTorch forward, original cache layout).
# --------------------------------------------------------------------------
def reference_forward(x, start_pos, cos, sin, wq, wk, wv, wo,
                      cache_k, cache_v, n_heads, n_kv_heads):
    B, S, D = x.shape
    hd = D // n_heads
    n_rep = n_heads // n_kv_heads

    xq = (x @ wq.T).reshape(B, S, n_heads, hd)
    xk = (x @ wk.T).reshape(B, S, n_kv_heads, hd)
    xv = (x @ wv.T).reshape(B, S, n_kv_heads, hd)

    def rope(t):
        tr = t.reshape(*t.shape[:-1], hd // 2, 2)
        re, im = tr[..., 0], tr[..., 1]
        c = cos[None, :, None, :]
        s = sin[None, :, None, :]
        out = jnp.stack([re * c - im * s, re * s + im * c], axis=-1)
        return out.reshape(*t.shape)

    xq, xk = rope(xq), rope(xk)
    ck = lax.dynamic_update_slice(cache_k, xk, (0, start_pos, 0, 0))
    cv = lax.dynamic_update_slice(cache_v, xv, (0, start_pos, 0, 0))
    L = start_pos + S
    keys = jnp.repeat(ck[:B, :L], n_rep, axis=2).transpose(0, 2, 1, 3)
    values = jnp.repeat(cv[:B, :L], n_rep, axis=2).transpose(0, 2, 1, 3)
    q = xq.transpose(0, 2, 1, 3)
    scores = jnp.einsum("bhqd,bhkd->bhqk", q, keys) / math.sqrt(hd)
    scores = jax.nn.softmax(scores.astype(jnp.float32), axis=-1)
    o = jnp.einsum("bhqk,bhkd->bhqd", scores, values)
    o = o.transpose(0, 2, 1, 3).reshape(B, S, -1)
    return o @ wo.T


if __name__ == "__main__":
    # Small config consistent with ModelArgs semantics.
    B, S, D = 2, 8, 32
    n_heads, n_kv_heads = 4, 2
    hd = D // n_heads
    max_batch, max_seq = 2, 16
    start_pos = 4

    key = jax.random.PRNGKey(0)
    kx, kq, kk, kv, ko = jax.random.split(key, 5)
    x = jax.random.normal(kx, (B, S, D), jnp.float32)
    wq = jax.random.normal(kq, (n_heads * hd, D), jnp.float32) * 0.1
    wk = jax.random.normal(kk, (n_kv_heads * hd, D), jnp.float32) * 0.1
    wv = jax.random.normal(kv, (n_kv_heads * hd, D), jnp.float32) * 0.1
    wo = jax.random.normal(ko, (D, n_heads * hd), jnp.float32) * 0.1

    # Kernel-path KV cache: bf16, head-major [max_batch, n_kv, max_seq, hd].
    cache_k = jnp.zeros((max_batch, n_kv_heads, max_seq, hd), jnp.bfloat16)
    cache_v = jnp.zeros((max_batch, n_kv_heads, max_seq, hd), jnp.bfloat16)

    # Rotary factors for the current positions (freqs_complex = cos + i*sin).
    theta = 1.0 / (10000.0 ** (jnp.arange(0, hd, 2, dtype=jnp.float32) / hd))  # [hd/2]
    pos = jnp.arange(start_pos, start_pos + S, dtype=jnp.float32)              # [S]
    freqs = jnp.outer(pos, theta)                                              # [S, hd/2]
    cos, sin = jnp.cos(freqs), jnp.sin(freqs)

    out, new_ck, new_cv = self_attention_forward(
        x, start_pos, cos, sin, wq, wk, wv, wo, cache_k, cache_v,
        n_heads, n_kv_heads)
    out = jax.block_until_ready(out)

    # f32 reference with the module's original cache layout / dtype.
    ref_ck = jnp.zeros((max_batch, max_seq, n_kv_heads, hd), jnp.float32)
    ref_cv = jnp.zeros((max_batch, max_seq, n_kv_heads, hd), jnp.float32)
    ref = reference_forward(x, start_pos, cos, sin, wq, wk, wv, wo,
                            ref_ck, ref_cv, n_heads, n_kv_heads)

    max_err = float(jnp.max(jnp.abs(out - ref)))
    assert jnp.allclose(out, ref, atol=5e-2, rtol=5e-2), (
        f"mismatch vs reference (bf16 path), max abs err = {max_err}")

    print("KERNEL_OK")
</pallas_src>

<mosaic_0001>
module attributes {stable_mosaic.version = 11 : i64} {
  func.func @qkv_rope_kernel(%arg0: i32, %arg1: memref<1x8x32xbf16, #tpu.memory_space<vmem>>, %arg2: memref<32x16xbf16, #tpu.memory_space<vmem>>, %arg3: memref<32x16xbf16, #tpu.memory_space<vmem>>, %arg4: memref<32x8xbf16, #tpu.memory_space<vmem>>, %arg5: memref<32x8xbf16, #tpu.memory_space<vmem>>, %arg6: memref<32x16xbf16, #tpu.memory_space<vmem>>, %arg7: memref<8x16xf32, #tpu.memory_space<vmem>>, %arg8: memref<8x16xf32, #tpu.memory_space<vmem>>, %arg9: memref<8x8xf32, #tpu.memory_space<vmem>>, %arg10: memref<8x8xf32, #tpu.memory_space<vmem>>, %arg11: memref<1x8x32xbf16, #tpu.memory_space<vmem>>, %arg12: memref<1x8x16xbf16, #tpu.memory_space<vmem>>, %arg13: memref<1x8x16xbf16, #tpu.memory_space<vmem>>) attributes {dimension_semantics = [#tpu.dimension_semantics<parallel>], iteration_bounds = array<i64: 2>, scalar_prefetch = 0 : i64, scratch_operands = 0 : i64, tpu.core_type = #tpu.core_type<tc>, window_params = [{transform_indices = @transform_0, window_bounds = array<i64: 1, 8, 32>}, {pipeline_mode = #tpu.pipeline_mode<synchronous>, transform_indices = @transform_1, window_bounds = array<i64: 32, 16>}, {pipeline_mode = #tpu.pipeline_mode<synchronous>, transform_indices = @transform_2, window_bounds = array<i64: 32, 16>}, {pipeline_mode = #tpu.pipeline_mode<synchronous>, transform_indices = @transform_3, window_bounds = array<i64: 32, 8>}, {pipeline_mode = #tpu.pipeline_mode<synchronous>, transform_indices = @transform_4, window_bounds = array<i64: 32, 8>}, {pipeline_mode = #tpu.pipeline_mode<synchronous>, transform_indices = @transform_5, window_bounds = array<i64: 32, 16>}, {pipeline_mode = #tpu.pipeline_mode<synchronous>, transform_indices = @transform_6, window_bounds = array<i64: 8, 16>}, {pipeline_mode = #tpu.pipeline_mode<synchronous>, transform_indices = @transform_7, window_bounds = array<i64: 8, 16>}, {pipeline_mode = #tpu.pipeline_mode<synchronous>, transform_indices = @transform_8, window_bounds = array<i64: 8, 8>}, {pipeline_mode = #tpu.pipeline_mode<synchronous>, transform_indices = @transform_9, window_bounds = array<i64: 8, 8>}, {transform_indices = @transform_10, window_bounds = array<i64: 1, 8, 32>}, {transform_indices = @transform_11, window_bounds = array<i64: 1, 8, 16>}, {transform_indices = @transform_12, window_bounds = array<i64: 1, 8, 16>}]} {
    %c0 = arith.constant 0 : index
    %c0_0 = arith.constant 0 : index
    %c0_1 = arith.constant 0 : index
    %0 = vector.load %arg1[%c0, %c0_0, %c0_1] : memref<1x8x32xbf16, #tpu.memory_space<vmem>>, vector<1x8x32xbf16>
    %1 = vector.shape_cast %0 : vector<1x8x32xbf16> to vector<8x32xbf16>
    %c0_2 = arith.constant 0 : index
    %c0_3 = arith.constant 0 : index
    %2 = vector.load %arg2[%c0_2, %c0_3] : memref<32x16xbf16, #tpu.memory_space<vmem>>, vector<32x16xbf16>
    %cst = arith.constant dense<0.000000e+00> : vector<8x16xf32>
    %3 = tpu.matmul %1, %2, %cst {dimension_numbers = #tpu.dot_dimension_numbers<[1], [0], [0], [1], [0, 0, 1, 1], [], []>} : vector<8x32xbf16>, vector<32x16xbf16>, vector<8x16xf32> -> vector<8x16xf32>
    %c0_4 = arith.constant 0 : index
    %c0_5 = arith.constant 0 : index
    %4 = vector.load %arg3[%c0_4, %c0_5] : memref<32x16xbf16, #tpu.memory_space<vmem>>, vector<32x16xbf16>
    %cst_6 = arith.constant dense<0.000000e+00> : vector<8x16xf32>
    %5 = tpu.matmul %1, %4, %cst_6 {dimension_numbers = #tpu.dot_dimension_numbers<[1], [0], [0], [1], [0, 0, 1, 1], [], []>} : vector<8x32xbf16>, vector<32x16xbf16>, vector<8x16xf32> -> vector<8x16xf32>
    %c0_7 = arith.constant 0 : index
    %c0_8 = arith.constant 0 : index
    %6 = vector.load %arg7[%c0_7, %c0_8] : memref<8x16xf32, #tpu.memory_space<vmem>>, vector<8x16xf32>
    %c0_9 = arith.constant 0 : index
    %c0_10 = arith.constant 0 : index
    %7 = vector.load %arg8[%c0_9, %c0_10] : memref<8x16xf32, #tpu.memory_space<vmem>>, vector<8x16xf32>
    %8 = arith.mulf %3, %6 : vector<8x16xf32>
    %9 = arith.mulf %5, %7 : vector<8x16xf32>
    %10 = arith.subf %8, %9 : vector<8x16xf32>
    %11 = arith.mulf %5, %6 : vector<8x16xf32>
    %12 = arith.mulf %3, %7 : vector<8x16xf32>
    %13 = arith.addf %11, %12 : vector<8x16xf32>
    %14 = tpu.concatenate %10, %13 in 1 : vector<8x16xf32>, vector<8x16xf32> -> vector<8x32xf32>
    %15 = arith.truncf %14 : vector<8x32xf32> to vector<8x32xbf16>
    %c0_11 = arith.constant 0 : index
    %c0_12 = arith.constant 0 : index
    %c0_13 = arith.constant 0 : index
    %16 = vector.load %arg11[%c0_11, %c0_12, %c0_13] : memref<1x8x32xbf16, #tpu.memory_space<vmem>>, vector<1x8x32xbf16>
    %17 = vector.shape_cast %16 : vector<1x8x32xbf16> to vector<8x32xbf16>
    %18 = vector.shape_cast %15 : vector<8x32xbf16> to vector<1x8x32xbf16>
    tpu.vector_store %arg11[%c0_11, %c0_12, %c0_13], %18 {strides = array<i32>} : memref<1x8x32xbf16, #tpu.memory_space<vmem>>, vector<1x8x32xbf16>,
    %c0_14 = arith.constant 0 : index
    %c0_15 = arith.constant 0 : index
    %19 = vector.load %arg4[%c0_14, %c0_15] : memref<32x8xbf16, #tpu.memory_space<vmem>>, vector<32x8xbf16>
    %cst_16 = arith.constant dense<0.000000e+00> : vector<8x8xf32>
    %20 = tpu.matmul %1, %19, %cst_16 {dimension_numbers = #tpu.dot_dimension_numbers<[1], [0], [0], [1], [0, 0, 1, 1], [], []>} : vector<8x32xbf16>, vector<32x8xbf16>, vector<8x8xf32> -> vector<8x8xf32>
    %c0_17 = arith.constant 0 : index
    %c0_18 = arith.constant 0 : index
    %21 = vector.load %arg5[%c0_17, %c0_18] : memref<32x8xbf16, #tpu.memory_space<vmem>>, vector<32x8xbf16>
    %cst_19 = arith.constant dense<0.000000e+00> : vector<8x8xf32>
    %22 = tpu.matmul %1, %21, %cst_19 {dimension_numbers = #tpu.dot_dimension_numbers<[1], [0], [0], [1], [0, 0, 1, 1], [], []>} : vector<8x32xbf16>, vector<32x8xbf16>, vector<8x8xf32> -> vector<8x8xf32>
    %c0_20 = arith.constant 0 : index
    %c0_21 = arith.constant 0 : index
    %23 = vector.load %arg9[%c0_20, %c0_21] : memref<8x8xf32, #tpu.memory_space<vmem>>, vector<8x8xf32>
    %c0_22 = arith.constant 0 : index
    %c0_23 = arith.constant 0 : index
    %24 = vector.load %arg10[%c0_22, %c0_23] : memref<8x8xf32, #tpu.memory_space<vmem>>, vector<8x8xf32>
    %25 = arith.mulf %20, %23 : vector<8x8xf32>
    %26 = arith.mulf %22, %24 : vector<8x8xf32>
    %27 = arith.subf %25, %26 : vector<8x8xf32>
    %28 = arith.mulf %22, %23 : vector<8x8xf32>
    %29 = arith.mulf %20, %24 : vector<8x8xf32>
    %30 = arith.addf %28, %29 : vector<8x8xf32>
    %31 = tpu.concatenate %27, %30 in 1 : vector<8x8xf32>, vector<8x8xf32> -> vector<8x16xf32>
    %32 = arith.truncf %31 : vector<8x16xf32> to vector<8x16xbf16>
    %c0_24 = arith.constant 0 : index
    %c0_25 = arith.constant 0 : index
    %c0_26 = arith.constant 0 : index
    %33 = vector.load %arg12[%c0_24, %c0_25, %c0_26] : memref<1x8x16xbf16, #tpu.memory_space<vmem>>, vector<1x8x16xbf16>
    %34 = vector.shape_cast %33 : vector<1x8x16xbf16> to vector<8x16xbf16>
    %35 = vector.shape_cast %32 : vector<8x16xbf16> to vector<1x8x16xbf16>
    tpu.vector_store %arg12[%c0_24, %c0_25, %c0_26], %35 {strides = array<i32>} : memref<1x8x16xbf16, #tpu.memory_space<vmem>>, vector<1x8x16xbf16>,
    %c0_27 = arith.constant 0 : index
    %c0_28 = arith.constant 0 : index
    %36 = vector.load %arg6[%c0_27, %c0_28] : memref<32x16xbf16, #tpu.memory_space<vmem>>, vector<32x16xbf16>
    %cst_29 = arith.constant dense<0.000000e+00> : vector<8x16xf32>
    %37 = tpu.matmul %1, %36, %cst_29 {dimension_numbers = #tpu.dot_dimension_numbers<[1], [0], [0], [1], [0, 0, 1, 1], [], []>} : vector<8x32xbf16>, vector<32x16xbf16>, vector<8x16xf32> -> vector<8x16xf32>
    %38 = arith.truncf %37 : vector<8x16xf32> to vector<8x16xbf16>
    %c0_30 = arith.constant 0 : index
    %c0_31 = arith.constant 0 : index
    %c0_32 = arith.constant 0 : index
    %39 = vector.load %arg13[%c0_30, %c0_31, %c0_32] : memref<1x8x16xbf16, #tpu.memory_space<vmem>>, vector<1x8x16xbf16>
    %40 = vector.shape_cast %39 : vector<1x8x16xbf16> to vector<8x16xbf16>
    %41 = vector.shape_cast %38 : vector<8x16xbf16> to vector<1x8x16xbf16>
    tpu.vector_store %arg13[%c0_30, %c0_31, %c0_32], %41 {strides = array<i32>} : memref<1x8x16xbf16, #tpu.memory_space<vmem>>, vector<1x8x16xbf16>,
    return
  }
  func.func @transform_0(%arg0: i32) -> (i32, i32, i32) {
    %c0_i32 = arith.constant 0 : i32
    %c0_i32_0 = arith.constant 0 : i32
    %c0_i32_1 = arith.constant 0 : i32
    return %arg0, %c0_i32, %c0_i32_0 : i32, i32, i32
  }
  func.func @transform_1(%arg0: i32) -> (i32, i32) {
    %c0_i32 = arith.constant 0 : i32
    %c0_i32_0 = arith.constant 0 : i32
    %c0_i32_1 = arith.constant 0 : i32
    return %c0_i32, %c0_i32_0 : i32, i32
  }
  func.func @transform_2(%arg0: i32) -> (i32, i32) {
    %c0_i32 = arith.constant 0 : i32
    %c0_i32_0 = arith.constant 0 : i32
    %c0_i32_1 = arith.constant 0 : i32
    return %c0_i32, %c0_i32_0 : i32, i32
  }
  func.func @transform_3(%arg0: i32) -> (i32, i32) {
    %c0_i32 = arith.constant 0 : i32
    %c0_i32_0 = arith.constant 0 : i32
    %c0_i32_1 = arith.constant 0 : i32
    return %c0_i32, %c0_i32_0 : i32, i32
  }
  func.func @transform_4(%arg0: i32) -> (i32, i32) {
    %c0_i32 = arith.constant 0 : i32
    %c0_i32_0 = arith.constant 0 : i32
    %c0_i32_1 = arith.constant 0 : i32
    return %c0_i32, %c0_i32_0 : i32, i32
  }
  func.func @transform_5(%arg0: i32) -> (i32, i32) {
    %c0_i32 = arith.constant 0 : i32
    %c0_i32_0 = arith.constant 0 : i32
    %c0_i32_1 = arith.constant 0 : i32
    return %c0_i32, %c0_i32_0 : i32, i32
  }
  func.func @transform_6(%arg0: i32) -> (i32, i32) {
    %c0_i32 = arith.constant 0 : i32
    %c0_i32_0 = arith.constant 0 : i32
    %c0_i32_1 = arith.constant 0 : i32
    return %c0_i32, %c0_i32_0 : i32, i32
  }
  func.func @transform_7(%arg0: i32) -> (i32, i32) {
    %c0_i32 = arith.constant 0 : i32
    %c0_i32_0 = arith.constant 0 : i32
    %c0_i32_1 = arith.constant 0 : i32
    return %c0_i32, %c0_i32_0 : i32, i32
  }
  func.func @transform_8(%arg0: i32) -> (i32, i32) {
    %c0_i32 = arith.constant 0 : i32
    %c0_i32_0 = arith.constant 0 : i32
    %c0_i32_1 = arith.constant 0 : i32
    return %c0_i32, %c0_i32_0 : i32, i32
  }
  func.func @transform_9(%arg0: i32) -> (i32, i32) {
    %c0_i32 = arith.constant 0 : i32
    %c0_i32_0 = arith.constant 0 : i32
    %c0_i32_1 = arith.constant 0 : i32
    return %c0_i32, %c0_i32_0 : i32, i32
  }
  func.func @transform_10(%arg0: i32) -> (i32, i32, i32) {
    %c0_i32 = arith.constant 0 : i32
    %c0_i32_0 = arith.constant 0 : i32
    %c0_i32_1 = arith.constant 0 : i32
    return %arg0, %c0_i32, %c0_i32_0 : i32, i32, i32
  }
  func.func @transform_11(%arg0: i32) -> (i32, i32, i32) {
    %c0_i32 = arith.constant 0 : i32
    %c0_i32_0 = arith.constant 0 : i32
    %c0_i32_1 = arith.constant 0 : i32
    return %arg0, %c0_i32, %c0_i32_0 : i32, i32, i32
  }
  func.func @transform_12(%arg0: i32) -> (i32, i32, i32) {
    %c0_i32 = arith.constant 0 : i32
    %c0_i32_0 = arith.constant 0 : i32
    %c0_i32_1 = arith.constant 0 : i32
    return %arg0, %c0_i32, %c0_i32_0 : i32, i32, i32
  }
}

</mosaic_0001>

<llo_original>
// kernel: tpu_custom_call.1
$region0: #{tpu_custom_call.1}
  #allocation0 [shape = 'u32[]', space=smem, size = 0x4, offset = 0x4, fixed_abs, tag = 'smem constant byte address 0x4 - core index']
  #allocation1 [shape = 'u32[72,128]{1,0:T(1,128)}', space=vmem, size = 0x9000, scoped, tag = 'internal scratch']
  %s0 = inlined_call_operand.vmem [shape: bf16[2,8,32], index: 0, kind: input, shape index: {}]
  %s1 = inlined_call_operand.vmem [shape: bf16[32,16], index: 1, kind: input, shape index: {}]
  %s2 = inlined_call_operand.vmem [shape: bf16[32,16], index: 2, kind: input, shape index: {}]
  %s3 = inlined_call_operand.vmem [shape: bf16[32,8], index: 3, kind: input, shape index: {}]
  %s4 = inlined_call_operand.vmem [shape: bf16[32,8], index: 4, kind: input, shape index: {}]
  %s5 = inlined_call_operand.vmem [shape: bf16[32,16], index: 5, kind: input, shape index: {}]
  %s6 = inlined_call_operand.vmem [shape: f32[8,16], index: 6, kind: input, shape index: {}]
  %s7 = inlined_call_operand.vmem [shape: f32[8,16], index: 7, kind: input, shape index: {}]
  %s8 = inlined_call_operand.vmem [shape: f32[8,8], index: 8, kind: input, shape index: {}]
  %s9 = inlined_call_operand.vmem [shape: f32[8,8], index: 9, kind: input, shape index: {}]
  %s10 = inlined_call_operand.hbm [shape: bf16[2,8,32], index: 10, kind: output, shape index: {0}]
  %s11 = inlined_call_operand.hbm [shape: bf16[2,8,16], index: 11, kind: output, shape index: {1}]
  %s12 = inlined_call_operand.hbm [shape: bf16[2,8,16], index: 12, kind: output, shape index: {2}]
  %13 = xla_tuple %s10, %s11, %s12
  %s14 = sld [smem:[#allocation0]]
  $region89: #{tpu_custom_call.1} parent=0
    _
  %s16 = ssub.s32 1, %s14
  %s17 = scalar_select 0, %s16, %s14
  $region1: #{tpu_custom_call.1} parent=0
    #allocation2 [shape = 'u8[4096]{0}', space=vmem, size = 0x1000, scoped, tag = 'output window, operand 0']
    #allocation3 [shape = 's32[2]{0}', space=sflag, size = 0x8, scoped, tag = 'scoped memory for tpu_custom_call.1']
    #allocation4 [shape = 'u8[4096]{0}', space=vmem, size = 0x1000, scoped, tag = 'output window, operand 1']
    #allocation5 [shape = 's32[2]{0}', space=sflag, size = 0x8, scoped, tag = 'scoped memory for tpu_custom_call.1']
    #allocation6 [shape = 'u8[4096]{0}', space=vmem, size = 0x1000, scoped, tag = 'output window, operand 2']
    %18 = vsyncpa [#allocation3], 0
    %s19 = scalar_lea.sflag [#allocation3], 1
    %20 = vsyncpa %s19, 0
    %21 = vsyncpa [#allocation5], 0
    %s22 = scalar_lea.sflag [#allocation5], 1
    %23 = vsyncpa %s22, 0
    loop: start=0, step=1, limit=4
    $region2: #{tpu_custom_call.1} parent=1 // loop_pre_header
      _
    $region3: #{tpu_custom_call.1} parent=1 // loop_header
      %s25 = sphi 0, %s29
      %p26 = scmp.ge.s32.totalorder %s25, 4
      %s35 = sphi 0, %s37
      %s38 = sphi 0, %s35
      %s39 = sphi 0, %s38
      %s55 = sphi 0, %s39
      %s59 = sphi 0, %s59
      %s61 = sphi 0, %s59
      %s62 = sphi 0, %s61
      %s76 = sphi 0, %s62
      %s80 = sphi 0, %s80
      %s82 = sphi 0, %s80
      %s83 = sphi 0, %s82
      %s97 = sphi 0, %s83
      %s101 = sphi 0, %s101
      %s103 = sphi 0, %s101
      %s104 = sphi 0, %s103
      %s118 = sphi 0, %s104
      %s122 = sphi 0, %s122
      %s124 = sphi 0, %s122
      %s125 = sphi 0, %s124
      %s139 = sphi 0, %s125
      %s143 = sphi 0, %s143
      %s145 = sphi 0, %s143
      %s146 = sphi 0, %s145
      %s160 = sphi 0, %s146
      %s164 = sphi 0, %s164
      %s166 = sphi 0, %s164
      %s167 = sphi 0, %s166
      %s181 = sphi 0, %s167
      %s185 = sphi 0, %s185
      %s187 = sphi 0, %s185
      %s188 = sphi 0, %s187
      %s202 = sphi 0, %s188
      %s206 = sphi 0, %s206
      %s208 = sphi 0, %s206
      %s209 = sphi 0, %s208
      %s223 = sphi 0, %s209
      %s227 = sphi 0, %s227
      %s229 = sphi 0, %s227
      %s230 = sphi 0, %s229
      %s244 = sphi 0, %s230
      %s250 = sphi 0, %s252
      %s253 = sphi 0, %s250
      %s254 = sphi 0, %s253
      %s270 = sphi 0, %s254
      %s276 = sphi 0, %s278
      %s279 = sphi 0, %s276
      %s280 = sphi 0, %s279
      %s296 = sphi 0, %s280
      %s302 = sphi 0, %s304
      %s305 = sphi 0, %s302
      %s306 = sphi 0, %s305
      %s322 = sphi 0, %s306
    $region4: #{tpu_custom_call.1} parent=1 // loop_header_branch
      %28 = sbr.rel (%p26) target = $region8
    $region5: #{tpu_custom_call.1} parent=1 // loop_body
      %s30 = ssub.s32 %s25, 1
      %s31 = ssub.s32 %s25, 2
      %s32 = sadd.s32 %s25, 1
      %s33 = ssub.s32 %s25, %s32
      %p34 = scmp.eq.s32.totalorder %s33, 0
      %s36 = sadd.s32 %s35, 1
      %s37 = scalar_select %p34, %s35, %s36
      %p40 = pneg %p34
      %p41 = scmp.eq.s32.totalorder %s25, 1
      %p42 = por %p40, %p41
      %p43 = scmp.ne.s32.totalorder %s35, %s38
      %p44 = scmp.eq.s32.totalorder %s25, 0
      %p45 = por %p43, %p44
      %p46 = scmp.ne.s32.totalorder %s35, %s38
      %p47 = scmp.eq.s32.totalorder %s30, 1
      %p48 = por %p46, %p47
      %p49 = scmp.ne.s32.totalorder %s38, %s39
      %p50 = scmp.eq.s32.totalorder %s30, 0
      %p51 = por %p49, %p50
      %p52 = scmp.ne.s32.totalorder %s38, %s39
      %p53 = scmp.eq.s32.totalorder %s31, 1
      %p54 = por %p52, %p53
      %p56 = scmp.ne.s32.totalorder %s39, %s55
      %p57 = scmp.eq.s32.totalorder %s31, 0
      %p58 = por %p56, %p57
      %s60 = sadd.s32 %s59, 1
      %p63 = scmp.eq.s32.totalorder %s25, 1
      %p64 = scmp.ne.s32.totalorder %s59, %s61
      %p65 = scmp.eq.s32.totalorder %s25, 0
      %p66 = por %p64, %p65
      %p67 = scmp.ne.s32.totalorder %s59, %s61
      %p68 = scmp.eq.s32.totalorder %s30, 1
      %p69 = por %p67, %p68
      %p70 = scmp.ne.s32.totalorder %s61, %s62
      %p71 = scmp.eq.s32.totalorder %s30, 0
      %p72 = por %p70, %p71
      %p73 = scmp.ne.s32.totalorder %s61, %s62
      %p74 = scmp.eq.s32.totalorder %s31, 1
      %p75 = por %p73, %p74
      %p77 = scmp.ne.s32.totalorder %s62, %s76
      %p78 = scmp.eq.s32.totalorder %s31, 0
      %p79 = por %p77, %p78
      %s81 = sadd.s32 %s80, 1
      %p84 = scmp.eq.s32.totalorder %s25, 1
      %p85 = scmp.ne.s32.totalorder %s80, %s82
      %p86 = scmp.eq.s32.totalorder %s25, 0
      %p87 = por %p85, %p86
      %p88 = scmp.ne.s32.totalorder %s80, %s82
      %p89 = scmp.eq.s32.totalorder %s30, 1
      %p90 = por %p88, %p89
      %p91 = scmp.ne.s32.totalorder %s82, %s83
      %p92 = scmp.eq.s32.totalorder %s30, 0
      %p93 = por %p91, %p92
      %p94 = scmp.ne.s32.totalorder %s82, %s83
      %p95 = scmp.eq.s32.totalorder %s31, 1
      %p96 = por %p94, %p95
      %p98 = scmp.ne.s32.totalorder %s83, %s97
      %p99 = scmp.eq.s32.totalorder %s31, 0
      %p100 = por %p98, %p99
      %s102 = sadd.s32 %s101, 1
      %p105 = scmp.eq.s32.totalorder %s25, 1
      %p106 = scmp.ne.s32.totalorder %s101, %s103
      %p107 = scmp.eq.s32.totalorder %s25, 0
      %p108 = por %p106, %p107
      %p109 = scmp.ne.s32.totalorder %s101, %s103
      %p110 = scmp.eq.s32.totalorder %s30, 1
      %p111 = por %p109, %p110
      %p112 = scmp.ne.s32.totalorder %s103, %s104
      %p113 = scmp.eq.s32.totalorder %s30, 0
      %p114 = por %p112, %p113
      %p115 = scmp.ne.s32.totalorder %s103, %s104
      %p116 = scmp.eq.s32.totalorder %s31, 1
      %p117 = por %p115, %p116
      %p119 = scmp.ne.s32.totalorder %s104, %s118
      %p120 = scmp.eq.s32.totalorder %s31, 0
      %p121 = por %p119, %p120
      %s123 = sadd.s32 %s122, 1
      %p126 = scmp.eq.s32.totalorder %s25, 1
      %p127 = scmp.ne.s32.totalorder %s122, %s124
      %p128 = scmp.eq.s32.totalorder %s25, 0
      %p129 = por %p127, %p128
      %p130 = scmp.ne.s32.totalorder %s122, %s124
      %p131 = scmp.eq.s32.totalorder %s30, 1
      %p132 = por %p130, %p131
      %p133 = scmp.ne.s32.totalorder %s124, %s125
      %p134 = scmp.eq.s32.totalorder %s30, 0
      %p135 = por %p133, %p134
      %p136 = scmp.ne.s32.totalorder %s124, %s125
      %p137 = scmp.eq.s32.totalorder %s31, 1
      %p138 = por %p136, %p137
      %p140 = scmp.ne.s32.totalorder %s125, %s139
      %p141 = scmp.eq.s32.totalorder %s31, 0
      %p142 = por %p140, %p141
      %s144 = sadd.s32 %s143, 1
      %p147 = scmp.eq.s32.totalorder %s25, 1
      %p148 = scmp.ne.s32.totalorder %s143, %s145
      %p149 = scmp.eq.s32.totalorder %s25, 0
      %p150 = por %p148, %p149
      %p151 = scmp.ne.s32.totalorder %s143, %s145
      %p152 = scmp.eq.s32.totalorder %s30, 1
      %p153 = por %p151, %p152
      %p154 = scmp.ne.s32.totalorder %s145, %s146
      %p155 = scmp.eq.s32.totalorder %s30, 0
      %p156 = por %p154, %p155
      %p157 = scmp.ne.s32.totalorder %s145, %s146
      %p158 = scmp.eq.s32.totalorder %s31, 1
      %p159 = por %p157, %p158
      %p161 = scmp.ne.s32.totalorder %s146, %s160
      %p162 = scmp.eq.s32.totalorder %s31, 0
      %p163 = por %p161, %p162
      %s165 = sadd.s32 %s164, 1
      %p168 = scmp.eq.s32.totalorder %s25, 1
      %p169 = scmp.ne.s32.totalorder %s164, %s166
      %p170 = scmp.eq.s32.totalorder %s25, 0
      %p171 = por %p169, %p170
      %p172 = scmp.ne.s32.totalorder %s164, %s166
      %p173 = scmp.eq.s32.totalorder %s30, 1
      %p174 = por %p172, %p173
      %p175 = scmp.ne.s32.totalorder %s166, %s167
      %p176 = scmp.eq.s32.totalorder %s30, 0
      %p177 = por %p175, %p176
      %p178 = scmp.ne.s32.totalorder %s166, %s167
      %p179 = scmp.eq.s32.totalorder %s31, 1
      %p180 = por %p178, %p179
      %p182 = scmp.ne.s32.totalorder %s167, %s181
      %p183 = scmp.eq.s32.totalorder %s31, 0
      %p184 = por %p182, %p183
      %s186 = sadd.s32 %s185, 1
      %p189 = scmp.eq.s32.totalorder %s25, 1
      %p190 = scmp.ne.s32.totalorder %s185, %s187
      %p191 = scmp.eq.s32.totalorder %s25, 0
      %p192 = por %p190, %p191
      %p193 = scmp.ne.s32.totalorder %s185, %s187
      %p194 = scmp.eq.s32.totalorder %s30, 1
      %p195 = por %p193, %p194
      %p196 = scmp.ne.s32.totalorder %s187, %s188
      %p197 = scmp.eq.s32.totalorder %s30, 0
      %p198 = por %p196, %p197
      %p199 = scmp.ne.s32.totalorder %s187, %s188
      %p200 = scmp.eq.s32.totalorder %s31, 1
      %p201 = por %p199, %p200
      %p203 = scmp.ne.s32.totalorder %s188, %s202
      %p204 = scmp.eq.s32.totalorder %s31, 0
      %p205 = por %p203, %p204
      %s207 = sadd.s32 %s206, 1
      %p210 = scmp.eq.s32.totalorder %s25, 1
      %p211 = scmp.ne.s32.totalorder %s206, %s208
      %p212 = scmp.eq.s32.totalorder %s25, 0
      %p213 = por %p211, %p212
      %p214 = scmp.ne.s32.totalorder %s206, %s208
      %p215 = scmp.eq.s32.totalorder %s30, 1
      %p216 = por %p214, %p215
      %p217 = scmp.ne.s32.totalorder %s208, %s209
      %p218 = scmp.eq.s32.totalorder %s30, 0
      %p219 = por %p217, %p218
      %p220 = scmp.ne.s32.totalorder %s208, %s209
      %p221 = scmp.eq.s32.totalorder %s31, 1
      %p222 = por %p220, %p221
      %p224 = scmp.ne.s32.totalorder %s209, %s223
      %p225 = scmp.eq.s32.totalorder %s31, 0
      %p226 = por %p224, %p225
      %s228 = sadd.s32 %s227, 1
      %p231 = scmp.eq.s32.totalorder %s25, 1
      %p232 = scmp.ne.s32.totalorder %s227, %s229
      %p233 = scmp.eq.s32.totalorder %s25, 0
      %p234 = por %p232, %p233
      %p235 = scmp.ne.s32.totalorder %s227, %s229
      %p236 = scmp.eq.s32.totalorder %s30, 1
      %p237 = por %p235, %p236
      %p238 = scmp.ne.s32.totalorder %s229, %s230
      %p239 = scmp.eq.s32.totalorder %s30, 0
      %p240 = por %p238, %p239
      %p241 = scmp.ne.s32.totalorder %s229, %s230
      %p242 = scmp.eq.s32.totalorder %s31, 1
      %p243 = por %p241, %p242
      %p245 = scmp.ne.s32.totalorder %s230, %s244
      %p246 = scmp.eq.s32.totalorder %s31, 0
      %p247 = por %p245, %p246
      %s248 = ssub.s32 %s25, %s32
      %p249 = scmp.eq.s32.totalorder %s248, 0
      %s251 = sadd.s32 %s250, 1
      %s252 = scalar_select %p249, %s250, %s251
      %p255 = pneg %p249
      %p256 = scmp.eq.s32.totalorder %s25, 1
      %p257 = por %p255, %p256
      %p258 = scmp.ne.s32.totalorder %s250, %s253
      %p259 = scmp.eq.s32.totalorder %s25, 0
      %p260 = por %p258, %p259
      %p261 = scmp.ne.s32.totalorder %s250, %s253
      %p262 = scmp.eq.s32.totalorder %s30, 1
      %p263 = por %p261, %p262
      %p264 = scmp.ne.s32.totalorder %s253, %s254
      %p265 = scmp.eq.s32.totalorder %s30, 0
      %p266 = por %p264, %p265
      %p267 = scmp.ne.s32.totalorder %s253, %s254
      %p268 = scmp.eq.s32.totalorder %s31, 1
      %p269 = por %p267, %p268
      %p271 = scmp.ne.s32.totalorder %s254, %s270
      %p272 = scmp.eq.s32.totalorder %s31, 0
      %p273 = por %p271, %p272
      %s274 = ssub.s32 %s25, %s32
      %p275 = scmp.eq.s32.totalorder %s274, 0
      %s277 = sadd.s32 %s276, 1
      %s278 = scalar_select %p275, %s276, %s277
      %p281 = pneg %p275
      %p282 = scmp.eq.s32.totalorder %s25, 1
      %p283 = por %p281, %p282
      %p284 = scmp.ne.s32.totalorder %s276, %s279
      %p285 = scmp.eq.s32.totalorder %s25, 0
      %p286 = por %p284, %p285
      %p287 = scmp.ne.s32.totalorder %s276, %s279
      %p288 = scmp.eq.s32.totalorder %s30, 1
      %p289 = por %p287, %p288
      %p290 = scmp.ne.s32.totalorder %s279, %s280
      %p291 = scmp.eq.s32.totalorder %s30, 0
      %p292 = por %p290, %p291
      %p293 = scmp.ne.s32.totalorder %s279, %s280
      %p294 = scmp.eq.s32.totalorder %s31, 1
      %p295 = por %p293, %p294
      %p297 = scmp.ne.s32.totalorder %s280, %s296
      %p298 = scmp.eq.s32.totalorder %s31, 0
      %p299 = por %p297, %p298
      %s300 = ssub.s32 %s25, %s32
      %p301 = scmp.eq.s32.totalorder %s300, 0
      %s303 = sadd.s32 %s302, 1
      %s304 = scalar_select %p301, %s302, %s303
      %p307 = pneg %p301
      %p308 = scmp.eq.s32.totalorder %s25, 1
      %p309 = por %p307, %p308
      %p310 = scmp.ne.s32.totalorder %s302, %s305
      %p311 = scmp.eq.s32.totalorder %s25, 0
      %p312 = por %p310, %p311
      %p313 = scmp.ne.s32.totalorder %s302, %s305
      %p314 = scmp.eq.s32.totalorder %s30, 1
      %p315 = por %p313, %p314
      %p316 = scmp.ne.s32.totalorder %s305, %s306
      %p317 = scmp.eq.s32.totalorder %s30, 0
      %p318 = por %p316, %p317
      %p319 = scmp.ne.s32.totalorder %s305, %s306
      %p320 = scmp.eq.s32.totalorder %s31, 1
      %p321 = por %p319, %p320
      %p323 = scmp.ne.s32.totalorder %s306, %s322
      %p324 = scmp.eq.s32.totalorder %s31, 0
      %p325 = por %p323, %p324
      %p326 = scmp.le.s32.totalorder 1, %s25
      %p327 = scmp.lt.s32.totalorder %s25, 3
      %p328 = pnand %p326, %p327
      %p329 = pneg %p328
      // Predicated region
      $region9: #{tpu_custom_call.1} parent=5 // pred_check
        _
      $region10: #{tpu_custom_call.1} parent=5 // pred_check_branch
        %331 = sbr.rel (%p328) target = $region12
      $region11: #{tpu_custom_call.1} parent=5 // pred_region
        %s332 = ssub.s32 %s25, 1
        // Predicated region
        $region13: #{tpu_custom_call.1} parent=11 // pred_check
          %p333 = pneg %p72
        $region14: #{tpu_custom_call.1} parent=11 // pred_check_branch
          %335 = sbr.rel (%p333) target = $region16
        $region15: #{tpu_custom_call.1} parent=11 // pred_region
          _
        $region16: #{tpu_custom_call.1} parent=11 // pred_fallthru
          _
        // Predicated region
        $region17: #{tpu_custom_call.1} parent=11 // pred_check
          %p336 = pneg %p93
        $region18: #{tpu_custom_call.1} parent=11 // pred_check_branch
          %338 = sbr.rel (%p336) target = $region20
        $region19: #{tpu_custom_call.1} parent=11 // pred_region
          _
        $region20: #{tpu_custom_call.1} parent=11 // pred_fallthru
          _
        // Predicated region
        $region21: #{tpu_custom_call.1} parent=11 // pred_check
          %p339 = pneg %p114
        $region22: #{tpu_custom_call.1} parent=11 // pred_check_branch
          %341 = sbr.rel (%p339) target = $region24
        $region23: #{tpu_custom_call.1} parent=11 // pred_region
          _
        $region24: #{tpu_custom_call.1} parent=11 // pred_fallthru
          _
        // Predicated region
        $region25: #{tpu_custom_call.1} parent=11 // pred_check
          %p342 = pneg %p135
        $region26: #{tpu_custom_call.1} parent=11 // pred_check_branch
          %344 = sbr.rel (%p342) target = $region28
        $region27: #{tpu_custom_call.1} parent=11 // pred_region
          _
        $region28: #{tpu_custom_call.1} parent=11 // pred_fallthru
          _
        // Predicated region
        $region29: #{tpu_custom_call.1} parent=11 // pred_check
          %p345 = pneg %p156
        $region30: #{tpu_custom_call.1} parent=11 // pred_check_branch
          %347 = sbr.rel (%p345) target = $region32
        $region31: #{tpu_custom_call.1} parent=11 // pred_region
          _
        $region32: #{tpu_custom_call.1} parent=11 // pred_fallthru
          _
        // Predicated region
        $region33: #{tpu_custom_call.1} parent=11 // pred_check
          %p348 = pneg %p177
        $region34: #{tpu_custom_call.1} parent=11 // pred_check_branch
          %350 = sbr.rel (%p348) target = $region36
        $region35: #{tpu_custom_call.1} parent=11 // pred_region
          _
        $region36: #{tpu_custom_call.1} parent=11 // pred_fallthru
          _
        // Predicated region
        $region37: #{tpu_custom_call.1} parent=11 // pred_check
          %p351 = pneg %p198
        $region38: #{tpu_custom_call.1} parent=11 // pred_check_branch
          %353 = sbr.rel (%p351) target = $region40
        $region39: #{tpu_custom_call.1} parent=11 // pred_region
          _
        $region40: #{tpu_custom_call.1} parent=11 // pred_fallthru
          _
        // Predicated region
        $region41: #{tpu_custom_call.1} parent=11 // pred_check
          %p354 = pneg %p219
        $region42: #{tpu_custom_call.1} parent=11 // pred_check_branch
          %356 = sbr.rel (%p354) target = $region44
        $region43: #{tpu_custom_call.1} parent=11 // pred_region
          _
        $region44: #{tpu_custom_call.1} parent=11 // pred_fallthru
          _
        // Predicated region
        $region45: #{tpu_custom_call.1} parent=11 // pred_check
          %p357 = pneg %p240
        $region46: #{tpu_custom_call.1} parent=11 // pred_check_branch
          %359 = sbr.rel (%p357) target = $region48
        $region47: #{tpu_custom_call.1} parent=11 // pred_region
          _
        $region48: #{tpu_custom_call.1} parent=11 // pred_fallthru
          _
      $region12: #{tpu_custom_call.1} parent=5 // pred_fallthru
        _
      %p360 = scmp.lt.s32.totalorder %s25, 2
      // Predicated region
      $region49: #{tpu_custom_call.1} parent=5 // pred_check
        %p361 = pneg %p360
      $region50: #{tpu_custom_call.1} parent=5 // pred_check_branch
        %363 = sbr.rel (%p361) target = $region52
      $region51: #{tpu_custom_call.1} parent=5 // pred_region
        // Predicated region
        $region53: #{tpu_custom_call.1} parent=51 // pred_check
          %p364 = pneg %p45
        $region54: #{tpu_custom_call.1} parent=51 // pred_check_branch
          %366 = sbr.rel (%p364) target = $region56
        $region55: #{tpu_custom_call.1} parent=51 // pred_region
          %p367 = scmp.lt.s32.totalorder %s25, 1
          %s368 = scalar_select %p367, %s25, 1
          %s369 = smul.addr %s368, 4
          %s370 = scalar_lea.vmem %s0, %s369
        $region56: #{tpu_custom_call.1} parent=51 // pred_fallthru
          _
      $region52: #{tpu_custom_call.1} parent=5 // pred_fallthru
        _
      %p371 = scmp.le.s32.totalorder 1, %s25
      %p372 = scmp.lt.s32.totalorder %s25, 3
      %p373 = pnand %p371, %p372
      %p374 = pneg %p373
      // Predicated region
      $region57: #{tpu_custom_call.1} parent=5 // pred_check
        _
      $region58: #{tpu_custom_call.1} parent=5 // pred_check_branch
        %376 = sbr.rel (%p373) target = $region60
      $region59: #{tpu_custom_call.1} parent=5 // pred_region
        %s377 = ssub.s32 %s25, 1
        %p378 = scmp.lt.s32.totalorder %s30, 1
        %s379 = scalar_select %p378, %s30, 1
        %s380 = smul.addr %s379, 4
        %s381 = scalar_lea.vmem %s0, %s380
        %p382 = pneg %p51
        %p383 = pneg %p48
        %p384 = pneg %p72
        %p385 = pneg %p69
        %p386 = pneg %p93
        %p387 = pneg %p90
        %p388 = pneg %p114
        %p389 = pneg %p111
        %p390 = pneg %p135
        %p391 = pneg %p132
        %p392 = pneg %p156
        %p393 = pneg %p153
        %p394 = pneg %p177
        %p395 = pneg %p174
        %p396 = pneg %p198
        %p397 = pneg %p195
        %p398 = pneg %p219
        %p399 = pneg %p216
        %p400 = pneg %p240
        %p401 = pneg %p237
        %p402 = pneg %p266
        %p403 = pneg %p263
        %s404 = sand.u32 %s253, 1
        %s405 = scalar_lea.sflag [#allocation3], %s404
        %s406 = sand.u32 %s253, 1
        %s407 = smul.addr %s406, 4
        %s408 = scalar_lea.vmem [#allocation2], %s407
        %p409 = pneg %p292
        %p410 = pneg %p289
        %s411 = sand.u32 %s30, 1
        %s412 = scalar_lea.sflag [#allocation5], %s411
        %s413 = sand.u32 %s279, 1
        %s414 = smul.addr %s413, 4
        %s415 = scalar_lea.vmem [#allocation4], %s414
        %p416 = pneg %p318
        %p417 = pneg %p315
        %s418 = sand.u32 %s30, 1
        %s419 = scalar_lea.sflag [#allocation5], %s418
        %s420 = sand.u32 %s305, 1
        %s421 = smul.addr %s420, 4
        %s422 = scalar_lea.vmem [#allocation6], %s421
        %p423 = scmp.lt.s32.totalorder %s30, 1
        %s424 = scalar_select %p423, %s30, 1
        %s425 = smul.addr %s424, 4
        %s426 = scalar_lea.vmem %s0, %s425
        %v428 = vld [vmem:[%s426] sm:$0xf]
        %v429 = vld [vmem:[%s1] sm:$0xf]
        %v430 = vld [vmem:[%s1 + $0x4] sm:$0xf]
        %v431 = vld [vmem:[%s1 + $0x8] sm:$0xf]
        %v432 = vld [vmem:[%s1 + $0xc] sm:$0xf]
        %v437 = vunpack.c.l.b16 %v429
        %v438 = vunpack.c.l.b16 %v430
        %v439 = vunpack.c.l.b16 %v431
        %v440 = vunpack.c.l.b16 %v432
        %v441 = vpack.c.b16 %v438, %v437
        %v442 = vpack.c.b16 %v440, %v439
        %vm445 = vcmask 261120
        %v447 = vsel %vm445, %v428, 0
        %449 = vmatpush.bf16.msra.mxu0 0
        %450 = vmatpush.bf16.msra.mxu0 0
        %451 = vmatpush.bf16.msra.mxu0 0
        %452 = vmatpush.bf16.msra.mxu0 0
        %453 = vmatpush.bf16.msra.mxu0 0
        %454 = vmatpush.bf16.msra.mxu0 0
        %455 = vmatpush.bf16.msra.mxu0 %v442
        %456 = vmatpush.bf16.msra.mxu0 %v441
        %457 = vmatmul.bf16.gmra.mxu0 %v447
        %v458 = vpop.f32.mrf.mxu0
        %v459 = vadd.f32 0.0, %v458
        %v460 = vpop.f32.mrf.mxu0
        %461 = vdwg.mxu0
        %v462 = vld [vmem:[%s2] sm:$0xf]
        %v463 = vld [vmem:[%s2 + $0x4] sm:$0xf]
        %v464 = vld [vmem:[%s2 + $0x8] sm:$0xf]
        %v465 = vld [vmem:[%s2 + $0xc] sm:$0xf]
        %v470 = vunpack.c.l.b16 %v462
        %v471 = vunpack.c.l.b16 %v463
        %v472 = vunpack.c.l.b16 %v464
        %v473 = vunpack.c.l.b16 %v465
        %v474 = vpack.c.b16 %v471, %v470
        %v475 = vpack.c.b16 %v473, %v472
        %478 = vmatpush.bf16.msra.mxu0 0
        %479 = vmatpush.bf16.msra.mxu0 0
        %480 = vmatpush.bf16.msra.mxu0 0
        %481 = vmatpush.bf16.msra.mxu0 0
        %482 = vmatpush.bf16.msra.mxu0 0
        %483 = vmatpush.bf16.msra.mxu0 0
        %484 = vmatpush.bf16.msra.mxu0 %v475
        %485 = vmatpush.bf16.msra.mxu0 %v474
        %486 = vmatmul.bf16.gmra.mxu0 %v447
        %v487 = vpop.f32.mrf.mxu0
        %v488 = vadd.f32 0.0, %v487
        %v489 = vpop.f32.mrf.mxu0
        %490 = vdwg.mxu0
        %v491 = vld [vmem:[%s6] sm:$0xff]
        %v492 = vld [vmem:[%s7] sm:$0xff]
        %v493 = vmul.f32 %v459, %v491
        %v494 = vmul.f32 %v488, %v492
        %v495 = vsub.f32 %v493, %v494
        %v496 = vmul.f32 %v488, %v491
        %v497 = vmul.f32 %v459, %v492
        %v498 = vadd.f32 %v496, %v497
        %500 = vrot.lane.b32.xlu0 %v498, 16
        %v501 = vpop.permute.xlu0 %500
        %vm503 = vcmask 130048
        %v504 = vsel %vm503, %v495, %v501
        %v505 = vpack.c.bf16 %v504, %v504
        %vm506 = vcmask 257024
        %507 = vst.msk [vmem:[%s408] sm:$0xf] %vm506, %v505
        %v508 = vld [vmem:[%s3] sm:$0xf]
        %v509 = vld [vmem:[%s3 + $0x4] sm:$0xf]
        %v510 = vld [vmem:[%s3 + $0x8] sm:$0xf]
        %v511 = vld [vmem:[%s3 + $0xc] sm:$0xf]
        %v516 = vunpack.c.l.b16 %v508
        %v517 = vunpack.c.l.b16 %v509
        %v518 = vunpack.c.l.b16 %v510
        %v519 = vunpack.c.l.b16 %v511
        %v520 = vpack.c.b16 %v517, %v516
        %v521 = vpack.c.b16 %v519, %v518
        %524 = vmatpush.bf16.msra.mxu0 0
        %525 = vmatpush.bf16.msra.mxu0 0
        %526 = vmatpush.bf16.msra.mxu0 0
        %527 = vmatpush.bf16.msra.mxu0 0
        %528 = vmatpush.bf16.msra.mxu0 0
        %529 = vmatpush.bf16.msra.mxu0 0
        %530 = vmatpush.bf16.msra.mxu0 %v521
        %531 = vmatpush.bf16.msra.mxu0 %v520
        %532 = vmatmul.bf16.gmra.mxu0 %v447
        %v533 = vpop.f32.mrf.mxu0
        %v534 = vadd.f32 0.0, %v533
        %v535 = vpop.f32.mrf.mxu0
        %536 = vdwg.mxu0
        %v537 = vld [vmem:[%s4] sm:$0xf]
        %v538 = vld [vmem:[%s4 + $0x4] sm:$0xf]
        %v539 = vld [vmem:[%s4 + $0x8] sm:$0xf]
        %v540 = vld [vmem:[%s4 + $0xc] sm:$0xf]
        %v545 = vunpack.c.l.b16 %v537
        %v546 = vunpack.c.l.b16 %v538
        %v547 = vunpack.c.l.b16 %v539
        %v548 = vunpack.c.l.b16 %v540
        %v549 = vpack.c.b16 %v546, %v545
        %v550 = vpack.c.b16 %v548, %v547
        %553 = vmatpush.bf16.msra.mxu0 0
        %554 = vmatpush.bf16.msra.mxu0 0
        %555 = vmatpush.bf16.msra.mxu0 0
        %556 = vmatpush.bf16.msra.mxu0 0
        %557 = vmatpush.bf16.msra.mxu0 0
        %558 = vmatpush.bf16.msra.mxu0 0
        %559 = vmatpush.bf16.msra.mxu0 %v550
        %560 = vmatpush.bf16.msra.mxu0 %v549
        %561 = vmatmul.bf16.gmra.mxu0 %v447
        %v562 = vpop.f32.mrf.mxu0
        %v563 = vadd.f32 0.0, %v562
        %v564 = vpop.f32.mrf.mxu0
        %565 = vdwg.mxu0
        %v566 = vld [vmem:[%s8] sm:$0xff]
        %v567 = vld [vmem:[%s9] sm:$0xff]
        %v568 = vmul.f32 %v534, %v566
        %v569 = vmul.f32 %v563, %v567
        %v570 = vsub.f32 %v568, %v569
        %v571 = vmul.f32 %v563, %v566
        %v572 = vmul.f32 %v534, %v567
        %v573 = vadd.f32 %v571, %v572
        %575 = vrot.lane.b32.xlu0 %v573, 8
        %v576 = vpop.permute.xlu0 %575
        %vm578 = vcmask 64512
        %v579 = vsel %vm578, %v570, %v576
        %v580 = vpack.c.bf16 %v579, %v579
        %vm581 = vcmask 125952
        %582 = vst.msk [vmem:[%s415] sm:$0xf] %vm581, %v580
        %v583 = vld [vmem:[%s5] sm:$0xf]
        %v584 = vld [vmem:[%s5 + $0x4] sm:$0xf]
        %v585 = vld [vmem:[%s5 + $0x8] sm:$0xf]
        %v586 = vld [vmem:[%s5 + $0xc] sm:$0xf]
        %v591 = vunpack.c.l.b16 %v583
        %v592 = vunpack.c.l.b16 %v584
        %v593 = vunpack.c.l.b16 %v585
        %v594 = vunpack.c.l.b16 %v586
        %v595 = vpack.c.b16 %v592, %v591
        %v596 = vpack.c.b16 %v594, %v593
        %599 = vmatpush.bf16.msra.mxu0 0
        %600 = vmatpush.bf16.msra.mxu0 0
        %601 = vmatpush.bf16.msra.mxu0 0
        %602 = vmatpush.bf16.msra.mxu0 0
        %603 = vmatpush.bf16.msra.mxu0 0
        %604 = vmatpush.bf16.msra.mxu0 0
        %605 = vmatpush.bf16.msra.mxu0 %v596
        %606 = vmatpush.bf16.msra.mxu0 %v595
        %607 = vmatmul.bf16.gmra.mxu0 %v447
        %v608 = vpop.f32.mrf.mxu0
        %v609 = vadd.f32 0.0, %v608
        %v610 = vpop.f32.mrf.mxu0
        %611 = vdwg.mxu0
        %v612 = vpack.c.bf16 %v609, %v609
        %613 = vst.msk [vmem:[%s422] sm:$0xf] %vm581, %v612
        %s614 = sand.u32 %s253, 1
        %s615 = scalar_lea.sflag [#allocation3], %s614
        %s616 = sand.u32 %s253, 1
        %s617 = smul.addr %s616, 4
        %s618 = scalar_lea.vmem [#allocation2], %s617
        %s619 = sand.u32 %s30, 1
        %s620 = scalar_lea.sflag [#allocation5], %s619
        %s621 = sand.u32 %s279, 1
        %s622 = smul.addr %s621, 4
        %s623 = scalar_lea.vmem [#allocation4], %s622
        %s624 = sand.u32 %s30, 1
        %s625 = scalar_lea.sflag [#allocation5], %s624
        %s626 = sand.u32 %s305, 1
        %s627 = smul.addr %s626, 4
        %s628 = scalar_lea.vmem [#allocation6], %s627
        // Predicated region
        $region61: #{tpu_custom_call.1} parent=59 // pred_check
          %p629 = pneg %p263
        $region62: #{tpu_custom_call.1} parent=59 // pred_check_branch
          %631 = sbr.rel (%p629) target = $region64
        $region63: #{tpu_custom_call.1} parent=59 // pred_region
          %633 = vsyncadd %s615, 0
          %s634 = smul.addr %s30, 4
          %s635 = scalar_lea.hbm %s10, %s634
          %s637 = sshll.u32 %s618, 4
          %s638 = int_to_ptr.vmem [resolvable:$true] %s637
          %s639 = sshll.u32 %s635, 4
          %s640 = int_to_ptr.hbm [resolvable:$true] %s639
          %642 = dma.vmem_to_hbm [thread:$0]  %s638, 64, %s640, %s615
        $region64: #{tpu_custom_call.1} parent=59 // pred_fallthru
          _
        // Predicated region
        $region65: #{tpu_custom_call.1} parent=59 // pred_check
          %p643 = pneg %p289
        $region66: #{tpu_custom_call.1} parent=59 // pred_check_branch
          %645 = sbr.rel (%p643) target = $region68
        $region67: #{tpu_custom_call.1} parent=59 // pred_region
          %647 = vsyncadd %s620, 0
          %s648 = smul.addr %s30, 4
          %s649 = scalar_lea.hbm %s11, %s648
          %s651 = sshll.u32 %s623, 4
          %s652 = int_to_ptr.vmem [resolvable:$true] %s651
          %s653 = sshll.u32 %s649, 4
          %s654 = int_to_ptr.hbm [resolvable:$true] %s653
          %656 = dma.vmem_to_hbm [thread:$0]  %s652, 64, %s654, %s620
        $region68: #{tpu_custom_call.1} parent=59 // pred_fallthru
          _
        // Predicated region
        $region69: #{tpu_custom_call.1} parent=59 // pred_check
          %p657 = pneg %p315
        $region70: #{tpu_custom_call.1} parent=59 // pred_check_branch
          %659 = sbr.rel (%p657) target = $region72
        $region71: #{tpu_custom_call.1} parent=59 // pred_region
          %661 = vsyncadd %s625, 0
          %s662 = smul.addr %s30, 4
          %s663 = scalar_lea.hbm %s12, %s662
          %s665 = sshll.u32 %s628, 4
          %s666 = int_to_ptr.vmem [resolvable:$true] %s665
          %s667 = sshll.u32 %s663, 4
          %s668 = int_to_ptr.hbm [resolvable:$true] %s667
          %670 = dma.vmem_to_hbm [thread:$0]  %s666, 64, %s668, %s625
        $region72: #{tpu_custom_call.1} parent=59 // pred_fallthru
          _
      $region60: #{tpu_custom_call.1} parent=5 // pred_fallthru
        _
      %p671 = scmp.le.s32.totalorder 2, %s25
      // Predicated region
      $region73: #{tpu_custom_call.1} parent=5 // pred_check
        %p672 = pneg %p671
      $region74: #{tpu_custom_call.1} parent=5 // pred_check_branch
        %674 = sbr.rel (%p672) target = $region76
      $region75: #{tpu_custom_call.1} parent=5 // pred_region
        %s675 = ssub.s32 %s25, 2
        // Predicated region
        $region77: #{tpu_custom_call.1} parent=75 // pred_check
          %p676 = pneg %p269
        $region78: #{tpu_custom_call.1} parent=75 // pred_check_branch
          %678 = sbr.rel (%p676) target = $region80
        $region79: #{tpu_custom_call.1} parent=75 // pred_region
          %s679 = sand.u32 %s254, 1
          %s680 = scalar_lea.sflag [#allocation3], %s679
          %s681 = sand.u32 %s254, 1
          %s682 = smul.addr %s681, 4
          %s683 = scalar_lea.vmem [#allocation2], %s682
          %685 = dma.done %s680, 64
        $region80: #{tpu_custom_call.1} parent=75 // pred_fallthru
          _
        // Predicated region
        $region81: #{tpu_custom_call.1} parent=75 // pred_check
          %p686 = pneg %p295
        $region82: #{tpu_custom_call.1} parent=75 // pred_check_branch
          %688 = sbr.rel (%p686) target = $region84
        $region83: #{tpu_custom_call.1} parent=75 // pred_region
          %s689 = sand.u32 %s31, 1
          %s690 = scalar_lea.sflag [#allocation5], %s689
          %s691 = sand.u32 %s280, 1
          %s692 = smul.addr %s691, 4
          %s693 = scalar_lea.vmem [#allocation4], %s692
          %695 = dma.done %s690, 64
        $region84: #{tpu_custom_call.1} parent=75 // pred_fallthru
          _
        // Predicated region
        $region85: #{tpu_custom_call.1} parent=75 // pred_check
          %p696 = pneg %p321
        $region86: #{tpu_custom_call.1} parent=75 // pred_check_branch
          %698 = sbr.rel (%p696) target = $region88
        $region87: #{tpu_custom_call.1} parent=75 // pred_region
          %s699 = sand.u32 %s31, 1
          %s700 = scalar_lea.sflag [#allocation5], %s699
          %s701 = sand.u32 %s306, 1
          %s702 = smul.addr %s701, 4
          %s703 = scalar_lea.vmem [#allocation6], %s702
          %705 = dma.done %s700, 64
        $region88: #{tpu_custom_call.1} parent=75 // pred_fallthru
          _
      $region76: #{tpu_custom_call.1} parent=5 // pred_fallthru
        _
    $region6: #{tpu_custom_call.1} parent=1 // loop_footer
      %s29 = sadd.s32 1, %s25
    $region7: #{tpu_custom_call.1} parent=1 // loop_footer_branch
      %24 = sbr.rel target = $region3
    $region8: #{tpu_custom_call.1} parent=1 // loop_exit
      _
    %706 = vsyncpa [#allocation3], 1
    %s707 = scalar_lea.sflag [#allocation3], 1
    %708 = vsyncpa %s707, 1
    %709 = vsyncpa [#allocation5], 1
    %s710 = scalar_lea.sflag [#allocation5], 1
    %711 = vsyncpa %s710, 1

</llo_original>
